<compile_context>
chip_gen: v6e
topology: v6e:2x2x1
jax: 0.10.0
libtpu: 0.0.40
codegen_flags: <defaults>
</compile_context>

<pallas_src>
import jax
import jax.numpy as jnp
from jax import lax
from jax.experimental import pallas as pl
from jax.experimental.pallas import tpu as pltpu

NEG_INF = -1e18


def _rgat_kernel(srclen_ref,            # SMEM (B,) int32 (scalar prefetch)
                 att_ref,               # VMEM (1, S, Hp) f32   tanh(QWq + KWk)
                 vp_ref,                # VMEM (1, S, Hp) f32   V Wv
                 emb_ref,               # VMEM (R, Hp, Nmax) f32  (emb_r transposed)
                 idx_ref,               # VMEM (R, 1, S, S) int32 (UNtransposed)
                 out_ref):              # VMEM (1, S, Hp) f32
    b = pl.program_id(0)
    S = att_ref.shape[1]
    Hp = att_ref.shape[2]
    R = emb_ref.shape[0]
    Nmax = emb_ref.shape[2]

    att = att_ref[0]                    # (S, Hp), rows indexed by key position j
    vp = vp_ref[0]                      # (S, Hp)
    length = srclen_ref[b]

    # key-position ids along the lane axis of the (query i, key j) score matrix
    key_ids = lax.broadcasted_iota(jnp.int32, (S, S), 1)
    valid = key_ids < length

    acc = jnp.zeros((S, Hp), jnp.float32)
    for r in range(R):                  # static unroll (R is small)
        tbl_hn = emb_ref[r]             # (Hp, Nmax) == emb_r^T, zero-padded rows/cols
        idx = idx_ref[r, 0]             # (S, S) untransposed: idx[j, i]

        # spk[j, n] = sum_h att[j, h] * emb_r[n, h]
        spk = jnp.dot(att, tbl_hn, preferred_element_type=jnp.float32)   # (S, Nmax)

        # key-major score: t[j, i] = spk[j, idx[j, i]]  via Nmax cheap selects
        # (replaces the (S, S, Nmax) one-hot temp + cross-lane reduce)
        t = jnp.zeros((S, S), jnp.float32)
        for n in range(Nmax):
            t = t + jnp.where(idx == n, spk[:, n:n + 1], 0.0)

        rel_score = t.T                 # query-major (i, j); single small in-reg transpose
        rel_score = jnp.where(valid, rel_score, NEG_INF)

        # softmax over keys j (last dim)
        m = jnp.max(rel_score, axis=-1, keepdims=True)
        e = jnp.exp(rel_score - m)
        denom = jnp.sum(e, axis=-1, keepdims=True)
        w = e * pl.reciprocal(denom, approx=True)

        acc = acc + jnp.dot(w, vp, preferred_element_type=jnp.float32)   # (S, Hp)

    out_ref[...] = acc[None].astype(out_ref.dtype)


def rgat_forward(query, key, value, src_len, rel_idx_stack, wq, wk, wv, emb_stack):
    """Pallas RGAT forward (learnable_weights=False path).

    query/key/value: (B, S, H) f32
    src_len:         (B,) int32
    rel_idx_stack:   (R, B, S, S) int32 (raw, NOT transposed)
    wq/wk/wv:        (H, H) f32  (stored (in, out): x @ W)
    emb_stack:       (R, Nmax, H) f32 (zero-padded to Nmax rows per relation)
    """
    B, S, H = query.shape
    R, Nmax, _ = emb_stack.shape

    # Lane-dense hidden dim: pad the projection *output* dim so att/vp are
    # produced already padded (tanh(0) = 0 and 0-columns of vp are sliced off).
    Hp = ((H + 127) // 128) * 128
    pad = Hp - H
    wq_p = jnp.pad(wq, ((0, 0), (0, pad)))
    wk_p = jnp.pad(wk, ((0, 0), (0, pad)))
    wv_p = jnp.pad(wv, ((0, 0), (0, pad)))

    # Hoisted projections: one (B*S, H) @ (H, Hp) matmul each in plain XLA.
    att = jnp.tanh(query @ wq_p + key @ wk_p)                    # (B, S, Hp)
    vp = value @ wv_p                                            # (B, S, Hp)

    # Pad + pre-transpose relation tables so the kernel contracts native layouts.
    emb_hn = jnp.transpose(jnp.pad(emb_stack, ((0, 0), (0, 0), (0, pad))),
                           (0, 2, 1))                            # (R, Hp, Nmax)

    idx = rel_idx_stack.astype(jnp.int32)                        # untransposed

    out_p = pl.pallas_call(
        _rgat_kernel,
        out_shape=jax.ShapeDtypeStruct((B, S, Hp), jnp.float32),
        grid_spec=pltpu.PrefetchScalarGridSpec(
            num_scalar_prefetch=1,
            grid=(B,),
            in_specs=[
                pl.BlockSpec((1, S, Hp), lambda b, sl: (b, 0, 0)),       # att
                pl.BlockSpec((1, S, Hp), lambda b, sl: (b, 0, 0)),       # vp
                pl.BlockSpec((R, Hp, Nmax), lambda b, sl: (0, 0, 0)),    # emb tables
                pl.BlockSpec((R, 1, S, S), lambda b, sl: (0, b, 0, 0)),  # relation indices
            ],
            out_specs=pl.BlockSpec((1, S, Hp), lambda b, sl: (b, 0, 0)),
        ),
        compiler_params=pltpu.CompilerParams(
            dimension_semantics=("parallel",)),                  # batch axis -> 2 TCs on v7x
    )(src_len.astype(jnp.int32), att, vp, emb_hn, idx)

    return out_p[:, :, :H]


def rgat_reference(query, key, value, src_len, rel_idx_stack, wq, wk, wv, emb_stack):
    """Pure-JAX reference mirroring the PyTorch forward (learnable_weights=False)."""
    B, S, H = query.shape
    att = jnp.tanh(query @ wq + key @ wk)                        # (B, S, H)
    vp = value @ wv                                              # (B, S, H)
    valid = jnp.arange(S)[None, :] < src_len[:, None]            # (B, S) key validity
    out = jnp.zeros((B, S, H), jnp.float32)
    for r in range(rel_idx_stack.shape[0]):
        idx_t = jnp.transpose(rel_idx_stack[r], (0, 2, 1))       # (B, S, S)
        relm = emb_stack[r][idx_t]                               # (B, S, S, H)
        score = jnp.sum(relm * att[:, None, :, :], axis=-1)      # (B, S, S)
        score = jnp.where(valid[:, None, :], score, NEG_INF)
        w = jax.nn.softmax(score, axis=-1)
        out = out + jnp.einsum('bij,bjh->bih', w, vp)
    return out


if __name__ == "__main__":
    # Module config: RGATLayer(input_size=H, hidden_size=H, relation_nums=[5, 7],
    #                          relation_matrix_num=2, learnable_weights=False)
    B, S, H = 2, 8, 32
    relation_nums = [5, 7]
    R = len(relation_nums)
    Nmax = 8  # pad embedding tables to a common row count

    key0 = jax.random.PRNGKey(0)
    ks = jax.random.split(key0, 10)

    query = jax.random.normal(ks[0], (B, S, H), dtype=jnp.float32)
    key_t = jax.random.normal(ks[1], (B, S, H), dtype=jnp.float32)
    value = jax.random.normal(ks[2], (B, S, H), dtype=jnp.float32)
    src_len = jnp.array([S, 5], dtype=jnp.int32)

    # Deterministic synthetic parameters (Linear weights stored as (in, out)).
    wq = jax.random.normal(ks[3], (H, H), dtype=jnp.float32) * 0.1
    wk = jax.random.normal(ks[4], (H, H), dtype=jnp.float32) * 0.1
    wv = jax.random.normal(ks[5], (H, H), dtype=jnp.float32) * 0.1

    emb_tables = []
    for i, num in enumerate(relation_nums):
        tbl = jax.random.normal(jax.random.fold_in(ks[6], i), (num, H), dtype=jnp.float32) * 0.2
        tbl = jnp.pad(tbl, ((0, Nmax - num), (0, 0)))
        emb_tables.append(tbl)
    emb_stack = jnp.stack(emb_tables, axis=0)                    # (R, Nmax, H)

    rel_idx_list = []
    for i, num in enumerate(relation_nums):
        idx = jax.random.randint(jax.random.fold_in(ks[7], i), (B, S, S), 0, num, dtype=jnp.int32)
        rel_idx_list.append(idx)
    rel_idx_stack = jnp.stack(rel_idx_list, axis=0)              # (R, B, S, S)

    out = rgat_forward(query, key_t, value, src_len, rel_idx_stack, wq, wk, wv, emb_stack)
    out = jax.block_until_ready(out)

    ref = rgat_reference(query, key_t, value, src_len, rel_idx_stack, wq, wk, wv, emb_stack)
    assert out.shape == (B, S, H)
    # tolerance loosened slightly to accommodate pl.reciprocal(approx=True)
    assert jnp.allclose(out, ref, atol=3e-3, rtol=3e-3), (
        f"max abs err {jnp.max(jnp.abs(out - ref))}")

    print("KERNEL_OK")
</pallas_src>

<mosaic_0001>
module attributes {stable_mosaic.version = 11 : i64} {
  func.func @_rgat_kernel(%arg0: i32, %arg1: memref<2xi32, #tpu.memory_space<smem>>, %arg2: memref<1x8x128xf32, #tpu.memory_space<vmem>>, %arg3: memref<1x8x128xf32, #tpu.memory_space<vmem>>, %arg4: memref<2x128x8xf32, #tpu.memory_space<vmem>>, %arg5: memref<2x1x8x8xi32, #tpu.memory_space<vmem>>, %arg6: memref<1x8x128xf32, #tpu.memory_space<vmem>>) attributes {dimension_semantics = [#tpu.dimension_semantics<parallel>], iteration_bounds = array<i64: 2>, scalar_prefetch = 1 : i64, scratch_operands = 0 : i64, tpu.core_type = #tpu.core_type<tc>, window_params = [{transform_indices = @transform_0, window_bounds = array<i64: 1, 8, 128>}, {transform_indices = @transform_1, window_bounds = array<i64: 1, 8, 128>}, {pipeline_mode = #tpu.pipeline_mode<synchronous>, transform_indices = @transform_2, window_bounds = array<i64: 2, 128, 8>}, {transform_indices = @transform_3, window_bounds = array<i64: 2, 1, 8, 8>}, {transform_indices = @transform_4, window_bounds = array<i64: 1, 8, 128>}]} {
    %c0 = arith.constant 0 : index
    %c0_0 = arith.constant 0 : index
    %c0_1 = arith.constant 0 : index
    %0 = vector.load %arg2[%c0, %c0_0, %c0_1] : memref<1x8x128xf32, #tpu.memory_space<vmem>>, vector<1x8x128xf32>
    %1 = vector.shape_cast %0 : vector<1x8x128xf32> to vector<8x128xf32>
    %c0_2 = arith.constant 0 : index
    %c0_3 = arith.constant 0 : index
    %c0_4 = arith.constant 0 : index
    %2 = vector.load %arg3[%c0_2, %c0_3, %c0_4] : memref<1x8x128xf32, #tpu.memory_space<vmem>>, vector<1x8x128xf32>
    %3 = vector.shape_cast %2 : vector<1x8x128xf32> to vector<8x128xf32>
    %4 = arith.index_cast %arg0 : i32 to index
    %5 = memref.load %arg1[%4] : memref<2xi32, #tpu.memory_space<smem>>
    %6 = tpu.iota {dimensions = array<i32: 1>} : vector<8x8xi32>
    %7 = vector.broadcast %5 : i32 to vector<8x8xi32>
    %8 = arith.cmpi slt, %6, %7 : vector<8x8xi32>
    %cst = arith.constant 0.000000e+00 : f32
    %9 = vector.broadcast %cst : f32 to vector<8x128xf32>
    %c0_5 = arith.constant 0 : index
    %c0_6 = arith.constant 0 : index
    %c0_7 = arith.constant 0 : index
    %10 = vector.load %arg4[%c0_5, %c0_6, %c0_7] : memref<2x128x8xf32, #tpu.memory_space<vmem>>, vector<1x128x8xf32>
    %11 = vector.shape_cast %10 : vector<1x128x8xf32> to vector<128x8xf32>
    %c0_8 = arith.constant 0 : index
    %c0_9 = arith.constant 0 : index
    %c0_10 = arith.constant 0 : index
    %c0_11 = arith.constant 0 : index
    %12 = vector.load %arg5[%c0_8, %c0_9, %c0_10, %c0_11] : memref<2x1x8x8xi32, #tpu.memory_space<vmem>>, vector<1x1x8x8xi32>
    %13 = vector.shape_cast %12 : vector<1x1x8x8xi32> to vector<8x8xi32>
    %cst_12 = arith.constant dense<0.000000e+00> : vector<8x8xf32>
    %14 = tpu.matmul %1, %11, %cst_12 {dimension_numbers = #tpu.dot_dimension_numbers<[1], [0], [0], [1], [0, 0, 1, 1], [], []>} : vector<8x128xf32>, vector<128x8xf32>, vector<8x8xf32> -> vector<8x8xf32>
    %cst_13 = arith.constant 0.000000e+00 : f32
    %15 = vector.broadcast %cst_13 : f32 to vector<8x8xf32>
    %c0_i32 = arith.constant 0 : i32
    %16 = vector.broadcast %c0_i32 : i32 to vector<8x8xi32>
    %17 = arith.cmpi eq, %13, %16 : vector<8x8xi32>
    %18 = vector.extract_strided_slice %14 {offsets = [0, 0], sizes = [8, 1], strides = [1, 1]} : vector<8x8xf32> to vector<8x1xf32>
    %cst_14 = arith.constant 0.000000e+00 : f32
    %19 = vector.shape_cast %18 : vector<8x1xf32> to vector<8x1xf32>
    %20 = vector.broadcast %19 : vector<8x1xf32> to vector<8x8xf32>
    %21 = vector.broadcast %cst_14 : f32 to vector<8x8xf32>
    %22 = arith.select %17, %20, %21 : vector<8x8xi1>, vector<8x8xf32>
    %23 = arith.addf %15, %22 : vector<8x8xf32>
    %c1_i32 = arith.constant 1 : i32
    %24 = vector.broadcast %c1_i32 : i32 to vector<8x8xi32>
    %25 = arith.cmpi eq, %13, %24 : vector<8x8xi32>
    %26 = vector.extract_strided_slice %14 {offsets = [0, 1], sizes = [8, 1], strides = [1, 1]} : vector<8x8xf32> to vector<8x1xf32>
    %cst_15 = arith.constant 0.000000e+00 : f32
    %27 = vector.shape_cast %26 : vector<8x1xf32> to vector<8x1xf32>
    %28 = vector.broadcast %27 : vector<8x1xf32> to vector<8x8xf32>
    %29 = vector.broadcast %cst_15 : f32 to vector<8x8xf32>
    %30 = arith.select %25, %28, %29 : vector<8x8xi1>, vector<8x8xf32>
    %31 = arith.addf %23, %30 : vector<8x8xf32>
    %c2_i32 = arith.constant 2 : i32
    %32 = vector.broadcast %c2_i32 : i32 to vector<8x8xi32>
    %33 = arith.cmpi eq, %13, %32 : vector<8x8xi32>
    %34 = vector.extract_strided_slice %14 {offsets = [0, 2], sizes = [8, 1], strides = [1, 1]} : vector<8x8xf32> to vector<8x1xf32>
    %cst_16 = arith.constant 0.000000e+00 : f32
    %35 = vector.shape_cast %34 : vector<8x1xf32> to vector<8x1xf32>
    %36 = vector.broadcast %35 : vector<8x1xf32> to vector<8x8xf32>
    %37 = vector.broadcast %cst_16 : f32 to vector<8x8xf32>
    %38 = arith.select %33, %36, %37 : vector<8x8xi1>, vector<8x8xf32>
    %39 = arith.addf %31, %38 : vector<8x8xf32>
    %c3_i32 = arith.constant 3 : i32
    %40 = vector.broadcast %c3_i32 : i32 to vector<8x8xi32>
    %41 = arith.cmpi eq, %13, %40 : vector<8x8xi32>
    %42 = vector.extract_strided_slice %14 {offsets = [0, 3], sizes = [8, 1], strides = [1, 1]} : vector<8x8xf32> to vector<8x1xf32>
    %cst_17 = arith.constant 0.000000e+00 : f32
    %43 = vector.shape_cast %42 : vector<8x1xf32> to vector<8x1xf32>
    %44 = vector.broadcast %43 : vector<8x1xf32> to vector<8x8xf32>
    %45 = vector.broadcast %cst_17 : f32 to vector<8x8xf32>
    %46 = arith.select %41, %44, %45 : vector<8x8xi1>, vector<8x8xf32>
    %47 = arith.addf %39, %46 : vector<8x8xf32>
    %c4_i32 = arith.constant 4 : i32
    %48 = vector.broadcast %c4_i32 : i32 to vector<8x8xi32>
    %49 = arith.cmpi eq, %13, %48 : vector<8x8xi32>
    %50 = vector.extract_strided_slice %14 {offsets = [0, 4], sizes = [8, 1], strides = [1, 1]} : vector<8x8xf32> to vector<8x1xf32>
    %cst_18 = arith.constant 0.000000e+00 : f32
    %51 = vector.shape_cast %50 : vector<8x1xf32> to vector<8x1xf32>
    %52 = vector.broadcast %51 : vector<8x1xf32> to vector<8x8xf32>
    %53 = vector.broadcast %cst_18 : f32 to vector<8x8xf32>
    %54 = arith.select %49, %52, %53 : vector<8x8xi1>, vector<8x8xf32>
    %55 = arith.addf %47, %54 : vector<8x8xf32>
    %c5_i32 = arith.constant 5 : i32
    %56 = vector.broadcast %c5_i32 : i32 to vector<8x8xi32>
    %57 = arith.cmpi eq, %13, %56 : vector<8x8xi32>
    %58 = vector.extract_strided_slice %14 {offsets = [0, 5], sizes = [8, 1], strides = [1, 1]} : vector<8x8xf32> to vector<8x1xf32>
    %cst_19 = arith.constant 0.000000e+00 : f32
    %59 = vector.shape_cast %58 : vector<8x1xf32> to vector<8x1xf32>
    %60 = vector.broadcast %59 : vector<8x1xf32> to vector<8x8xf32>
    %61 = vector.broadcast %cst_19 : f32 to vector<8x8xf32>
    %62 = arith.select %57, %60, %61 : vector<8x8xi1>, vector<8x8xf32>
    %63 = arith.addf %55, %62 : vector<8x8xf32>
    %c6_i32 = arith.constant 6 : i32
    %64 = vector.broadcast %c6_i32 : i32 to vector<8x8xi32>
    %65 = arith.cmpi eq, %13, %64 : vector<8x8xi32>
    %66 = vector.extract_strided_slice %14 {offsets = [0, 6], sizes = [8, 1], strides = [1, 1]} : vector<8x8xf32> to vector<8x1xf32>
    %cst_20 = arith.constant 0.000000e+00 : f32
    %67 = vector.shape_cast %66 : vector<8x1xf32> to vector<8x1xf32>
    %68 = vector.broadcast %67 : vector<8x1xf32> to vector<8x8xf32>
    %69 = vector.broadcast %cst_20 : f32 to vector<8x8xf32>
    %70 = arith.select %65, %68, %69 : vector<8x8xi1>, vector<8x8xf32>
    %71 = arith.addf %63, %70 : vector<8x8xf32>
    %c7_i32 = arith.constant 7 : i32
    %72 = vector.broadcast %c7_i32 : i32 to vector<8x8xi32>
    %73 = arith.cmpi eq, %13, %72 : vector<8x8xi32>
    %74 = vector.extract_strided_slice %14 {offsets = [0, 7], sizes = [8, 1], strides = [1, 1]} : vector<8x8xf32> to vector<8x1xf32>
    %cst_21 = arith.constant 0.000000e+00 : f32
    %75 = vector.shape_cast %74 : vector<8x1xf32> to vector<8x1xf32>
    %76 = vector.broadcast %75 : vector<8x1xf32> to vector<8x8xf32>
    %77 = vector.broadcast %cst_21 : f32 to vector<8x8xf32>
    %78 = arith.select %73, %76, %77 : vector<8x8xi1>, vector<8x8xf32>
    %79 = arith.addf %71, %78 : vector<8x8xf32>
    %80 = tpu.transpose %79, [1, 0] : vector<8x8xf32> -> vector<8x8xf32>
    %cst_22 = arith.constant -9.99999984E+17 : f32
    %81 = vector.broadcast %cst_22 : f32 to vector<8x8xf32>
    %82 = arith.select %8, %80, %81 : vector<8x8xi1>, vector<8x8xf32>
    %cst_23 = arith.constant dense<0xFF800000> : vector<8xf32>
    %83 = vector.multi_reduction <maximumf>, %82, %cst_23 [1] : vector<8x8xf32> to vector<8xf32>
    %84 = vector.shape_cast %83 : vector<8xf32> to vector<8x1xf32>
    %85 = vector.broadcast %84 : vector<8x1xf32> to vector<8x8xf32>
    %86 = arith.subf %82, %85 : vector<8x8xf32>
    %87 = math.exp %86 : vector<8x8xf32>
    %cst_24 = arith.constant dense<0.000000e+00> : vector<8xf32>
    %88 = vector.multi_reduction <add>, %87, %cst_24 [1] : vector<8x8xf32> to vector<8xf32>
    %89 = vector.shape_cast %88 : vector<8xf32> to vector<8x1xf32>
    %90 = tpu.reciprocal %89 {approx = true} : vector<8x1xf32> -> vector<8x1xf32>
    %91 = vector.broadcast %90 : vector<8x1xf32> to vector<8x8xf32>
    %92 = arith.mulf %87, %91 : vector<8x8xf32>
    %cst_25 = arith.constant dense<0.000000e+00> : vector<8x128xf32>
    %93 = tpu.matmul %92, %3, %cst_25 {dimension_numbers = #tpu.dot_dimension_numbers<[1], [0], [0], [1], [0, 0, 1, 1], [], []>} : vector<8x8xf32>, vector<8x128xf32>, vector<8x128xf32> -> vector<8x128xf32>
    %94 = arith.addf %9, %93 : vector<8x128xf32>
    %c1 = arith.constant 1 : index
    %c0_26 = arith.constant 0 : index
    %c0_27 = arith.constant 0 : index
    %95 = vector.load %arg4[%c1, %c0_26, %c0_27] : memref<2x128x8xf32, #tpu.memory_space<vmem>>, vector<1x128x8xf32>
    %96 = vector.shape_cast %95 : vector<1x128x8xf32> to vector<128x8xf32>
    %c1_28 = arith.constant 1 : index
    %c0_29 = arith.constant 0 : index
    %c0_30 = arith.constant 0 : index
    %c0_31 = arith.constant 0 : index
    %97 = vector.load %arg5[%c1_28, %c0_29, %c0_30, %c0_31] : memref<2x1x8x8xi32, #tpu.memory_space<vmem>>, vector<1x1x8x8xi32>
    %98 = vector.shape_cast %97 : vector<1x1x8x8xi32> to vector<8x8xi32>
    %cst_32 = arith.constant dense<0.000000e+00> : vector<8x8xf32>
    %99 = tpu.matmul %1, %96, %cst_32 {dimension_numbers = #tpu.dot_dimension_numbers<[1], [0], [0], [1], [0, 0, 1, 1], [], []>} : vector<8x128xf32>, vector<128x8xf32>, vector<8x8xf32> -> vector<8x8xf32>
    %cst_33 = arith.constant 0.000000e+00 : f32
    %100 = vector.broadcast %cst_33 : f32 to vector<8x8xf32>
    %c0_i32_34 = arith.constant 0 : i32
    %101 = vector.broadcast %c0_i32_34 : i32 to vector<8x8xi32>
    %102 = arith.cmpi eq, %98, %101 : vector<8x8xi32>
    %103 = vector.extract_strided_slice %99 {offsets = [0, 0], sizes = [8, 1], strides = [1, 1]} : vector<8x8xf32> to vector<8x1xf32>
    %cst_35 = arith.constant 0.000000e+00 : f32
    %104 = vector.shape_cast %103 : vector<8x1xf32> to vector<8x1xf32>
    %105 = vector.broadcast %104 : vector<8x1xf32> to vector<8x8xf32>
    %106 = vector.broadcast %cst_35 : f32 to vector<8x8xf32>
    %107 = arith.select %102, %105, %106 : vector<8x8xi1>, vector<8x8xf32>
    %108 = arith.addf %100, %107 : vector<8x8xf32>
    %c1_i32_36 = arith.constant 1 : i32
    %109 = vector.broadcast %c1_i32_36 : i32 to vector<8x8xi32>
    %110 = arith.cmpi eq, %98, %109 : vector<8x8xi32>
    %111 = vector.extract_strided_slice %99 {offsets = [0, 1], sizes = [8, 1], strides = [1, 1]} : vector<8x8xf32> to vector<8x1xf32>
    %cst_37 = arith.constant 0.000000e+00 : f32
    %112 = vector.shape_cast %111 : vector<8x1xf32> to vector<8x1xf32>
    %113 = vector.broadcast %112 : vector<8x1xf32> to vector<8x8xf32>
    %114 = vector.broadcast %cst_37 : f32 to vector<8x8xf32>
    %115 = arith.select %110, %113, %114 : vector<8x8xi1>, vector<8x8xf32>
    %116 = arith.addf %108, %115 : vector<8x8xf32>
    %c2_i32_38 = arith.constant 2 : i32
    %117 = vector.broadcast %c2_i32_38 : i32 to vector<8x8xi32>
    %118 = arith.cmpi eq, %98, %117 : vector<8x8xi32>
    %119 = vector.extract_strided_slice %99 {offsets = [0, 2], sizes = [8, 1], strides = [1, 1]} : vector<8x8xf32> to vector<8x1xf32>
    %cst_39 = arith.constant 0.000000e+00 : f32
    %120 = vector.shape_cast %119 : vector<8x1xf32> to vector<8x1xf32>
    %121 = vector.broadcast %120 : vector<8x1xf32> to vector<8x8xf32>
    %122 = vector.broadcast %cst_39 : f32 to vector<8x8xf32>
    %123 = arith.select %118, %121, %122 : vector<8x8xi1>, vector<8x8xf32>
    %124 = arith.addf %116, %123 : vector<8x8xf32>
    %c3_i32_40 = arith.constant 3 : i32
    %125 = vector.broadcast %c3_i32_40 : i32 to vector<8x8xi32>
    %126 = arith.cmpi eq, %98, %125 : vector<8x8xi32>
    %127 = vector.extract_strided_slice %99 {offsets = [0, 3], sizes = [8, 1], strides = [1, 1]} : vector<8x8xf32> to vector<8x1xf32>
    %cst_41 = arith.constant 0.000000e+00 : f32
    %128 = vector.shape_cast %127 : vector<8x1xf32> to vector<8x1xf32>
    %129 = vector.broadcast %128 : vector<8x1xf32> to vector<8x8xf32>
    %130 = vector.broadcast %cst_41 : f32 to vector<8x8xf32>
    %131 = arith.select %126, %129, %130 : vector<8x8xi1>, vector<8x8xf32>
    %132 = arith.addf %124, %131 : vector<8x8xf32>
    %c4_i32_42 = arith.constant 4 : i32
    %133 = vector.broadcast %c4_i32_42 : i32 to vector<8x8xi32>
    %134 = arith.cmpi eq, %98, %133 : vector<8x8xi32>
    %135 = vector.extract_strided_slice %99 {offsets = [0, 4], sizes = [8, 1], strides = [1, 1]} : vector<8x8xf32> to vector<8x1xf32>
    %cst_43 = arith.constant 0.000000e+00 : f32
    %136 = vector.shape_cast %135 : vector<8x1xf32> to vector<8x1xf32>
    %137 = vector.broadcast %136 : vector<8x1xf32> to vector<8x8xf32>
    %138 = vector.broadcast %cst_43 : f32 to vector<8x8xf32>
    %139 = arith.select %134, %137, %138 : vector<8x8xi1>, vector<8x8xf32>
    %140 = arith.addf %132, %139 : vector<8x8xf32>
    %c5_i32_44 = arith.constant 5 : i32
    %141 = vector.broadcast %c5_i32_44 : i32 to vector<8x8xi32>
    %142 = arith.cmpi eq, %98, %141 : vector<8x8xi32>
    %143 = vector.extract_strided_slice %99 {offsets = [0, 5], sizes = [8, 1], strides = [1, 1]} : vector<8x8xf32> to vector<8x1xf32>
    %cst_45 = arith.constant 0.000000e+00 : f32
    %144 = vector.shape_cast %143 : vector<8x1xf32> to vector<8x1xf32>
    %145 = vector.broadcast %144 : vector<8x1xf32> to vector<8x8xf32>
    %146 = vector.broadcast %cst_45 : f32 to vector<8x8xf32>
    %147 = arith.select %142, %145, %146 : vector<8x8xi1>, vector<8x8xf32>
    %148 = arith.addf %140, %147 : vector<8x8xf32>
    %c6_i32_46 = arith.constant 6 : i32
    %149 = vector.broadcast %c6_i32_46 : i32 to vector<8x8xi32>
    %150 = arith.cmpi eq, %98, %149 : vector<8x8xi32>
    %151 = vector.extract_strided_slice %99 {offsets = [0, 6], sizes = [8, 1], strides = [1, 1]} : vector<8x8xf32> to vector<8x1xf32>
    %cst_47 = arith.constant 0.000000e+00 : f32
    %152 = vector.shape_cast %151 : vector<8x1xf32> to vector<8x1xf32>
    %153 = vector.broadcast %152 : vector<8x1xf32> to vector<8x8xf32>
    %154 = vector.broadcast %cst_47 : f32 to vector<8x8xf32>
    %155 = arith.select %150, %153, %154 : vector<8x8xi1>, vector<8x8xf32>
    %156 = arith.addf %148, %155 : vector<8x8xf32>
    %c7_i32_48 = arith.constant 7 : i32
    %157 = vector.broadcast %c7_i32_48 : i32 to vector<8x8xi32>
    %158 = arith.cmpi eq, %98, %157 : vector<8x8xi32>
    %159 = vector.extract_strided_slice %99 {offsets = [0, 7], sizes = [8, 1], strides = [1, 1]} : vector<8x8xf32> to vector<8x1xf32>
    %cst_49 = arith.constant 0.000000e+00 : f32
    %160 = vector.shape_cast %159 : vector<8x1xf32> to vector<8x1xf32>
    %161 = vector.broadcast %160 : vector<8x1xf32> to vector<8x8xf32>
    %162 = vector.broadcast %cst_49 : f32 to vector<8x8xf32>
    %163 = arith.select %158, %161, %162 : vector<8x8xi1>, vector<8x8xf32>
    %164 = arith.addf %156, %163 : vector<8x8xf32>
    %165 = tpu.transpose %164, [1, 0] : vector<8x8xf32> -> vector<8x8xf32>
    %cst_50 = arith.constant -9.99999984E+17 : f32
    %166 = vector.broadcast %cst_50 : f32 to vector<8x8xf32>
    %167 = arith.select %8, %165, %166 : vector<8x8xi1>, vector<8x8xf32>
    %cst_51 = arith.constant dense<0xFF800000> : vector<8xf32>
    %168 = vector.multi_reduction <maximumf>, %167, %cst_51 [1] : vector<8x8xf32> to vector<8xf32>
    %169 = vector.shape_cast %168 : vector<8xf32> to vector<8x1xf32>
    %170 = vector.broadcast %169 : vector<8x1xf32> to vector<8x8xf32>
    %171 = arith.subf %167, %170 : vector<8x8xf32>
    %172 = math.exp %171 : vector<8x8xf32>
    %cst_52 = arith.constant dense<0.000000e+00> : vector<8xf32>
    %173 = vector.multi_reduction <add>, %172, %cst_52 [1] : vector<8x8xf32> to vector<8xf32>
    %174 = vector.shape_cast %173 : vector<8xf32> to vector<8x1xf32>
    %175 = tpu.reciprocal %174 {approx = true} : vector<8x1xf32> -> vector<8x1xf32>
    %176 = vector.broadcast %175 : vector<8x1xf32> to vector<8x8xf32>
    %177 = arith.mulf %172, %176 : vector<8x8xf32>
    %cst_53 = arith.constant dense<0.000000e+00> : vector<8x128xf32>
    %178 = tpu.matmul %177, %3, %cst_53 {dimension_numbers = #tpu.dot_dimension_numbers<[1], [0], [0], [1], [0, 0, 1, 1], [], []>} : vector<8x8xf32>, vector<8x128xf32>, vector<8x128xf32> -> vector<8x128xf32>
    %179 = arith.addf %94, %178 : vector<8x128xf32>
    %180 = vector.shape_cast %179 : vector<8x128xf32> to vector<1x8x128xf32>
    %c0_54 = arith.constant 0 : index
    %c0_55 = arith.constant 0 : index
    %c0_56 = arith.constant 0 : index
    %181 = vector.load %arg6[%c0_54, %c0_55, %c0_56] : memref<1x8x128xf32, #tpu.memory_space<vmem>>, vector<1x8x128xf32>
    tpu.vector_store %arg6[%c0_54, %c0_55, %c0_56], %180 {strides = array<i32>} : memref<1x8x128xf32, #tpu.memory_space<vmem>>, vector<1x8x128xf32>,
    return
  }
  func.func @transform_0(%arg0: i32, %arg1: memref<2xi32, #tpu.memory_space<smem>>) -> (i32, i32, i32) {
    %c0_i32 = arith.constant 0 : i32
    %c0_i32_0 = arith.constant 0 : i32
    %c0_i32_1 = arith.constant 0 : i32
    return %arg0, %c0_i32, %c0_i32_0 : i32, i32, i32
  }
  func.func @transform_1(%arg0: i32, %arg1: memref<2xi32, #tpu.memory_space<smem>>) -> (i32, i32, i32) {
    %c0_i32 = arith.constant 0 : i32
    %c0_i32_0 = arith.constant 0 : i32
    %c0_i32_1 = arith.constant 0 : i32
    return %arg0, %c0_i32, %c0_i32_0 : i32, i32, i32
  }
  func.func @transform_2(%arg0: i32, %arg1: memref<2xi32, #tpu.memory_space<smem>>) -> (i32, i32, i32) {
    %c0_i32 = arith.constant 0 : i32
    %c0_i32_0 = arith.constant 0 : i32
    %c0_i32_1 = arith.constant 0 : i32
    %c0_i32_2 = arith.constant 0 : i32
    return %c0_i32, %c0_i32_0, %c0_i32_1 : i32, i32, i32
  }
  func.func @transform_3(%arg0: i32, %arg1: memref<2xi32, #tpu.memory_space<smem>>) -> (i32, i32, i32, i32) {
    %c0_i32 = arith.constant 0 : i32
    %c0_i32_0 = arith.constant 0 : i32
    %c0_i32_1 = arith.constant 0 : i32
    %c0_i32_2 = arith.constant 0 : i32
    return %c0_i32, %arg0, %c0_i32_0, %c0_i32_1 : i32, i32, i32, i32
  }
  func.func @transform_4(%arg0: i32, %arg1: memref<2xi32, #tpu.memory_space<smem>>) -> (i32, i32, i32) {
    %c0_i32 = arith.constant 0 : i32
    %c0_i32_0 = arith.constant 0 : i32
    %c0_i32_1 = arith.constant 0 : i32
    return %arg0, %c0_i32, %c0_i32_0 : i32, i32, i32
  }
}

</mosaic_0001>

<llo_original>
// kernel: tpu_custom_call.1
$region0: #{tpu_custom_call.1}
  #allocation0 [shape = 'u32[]', space=smem, size = 0x4, offset = 0x4, fixed_abs, tag = 'smem constant byte address 0x4 - core index']
  #allocation1 [shape = 'u32[144,128]{1,0:T(1,128)}', space=vmem, size = 0x12000, scoped, tag = 'internal scratch']
  #allocation2 [shape = 's32[1]{0}', space=sflag, size = 0x4, scoped, tag = 'scoped memory for tpu_custom_call.1']
  #allocation3 [shape = 'u8[512]{0}', space=smem, size = 0x200, scoped, tag = 'prefetched SMEM operand 0']
  %s0 = inlined_call_operand.vmem [shape: s32[2], index: 0, kind: input, shape index: {}]
  %s1 = inlined_call_operand.vmem [shape: f32[2,8,128], index: 1, kind: input, shape index: {}]
  %s2 = inlined_call_operand.vmem [shape: f32[2,8,128], index: 2, kind: input, shape index: {}]
  %s3 = inlined_call_operand.vmem [shape: f32[2,128,8], index: 3, kind: input, shape index: {}]
  %s4 = inlined_call_operand.vmem [shape: s32[2,2,8,8], index: 4, kind: input, shape index: {}]
  %s5 = inlined_call_operand.hbm [shape: f32[2,8,128], index: 5, kind: output, shape index: {}]
  %s6 = sld [smem:[#allocation0]]
  $region87: #{tpu_custom_call.1} parent=0
    _
  %s8 = ssub.s32 1, %s6
  %s9 = scalar_select 0, %s8, %s6
  %s10 = sshll.u32 %s0, 4
  %s11 = int_to_ptr.vmem [resolvable:$true] %s10
  %13 = dma.vmem_to_smem %s11, 16, [#allocation3], [#allocation2]
  %14 = dma.done [#allocation2], 16
  %15 = sfence
  $region1: #{tpu_custom_call.1} parent=0
    #allocation4 [shape = 'u8[16384]{0}', space=vmem, size = 0x4000, scoped, tag = 'input window, operand 4']
    #allocation5 [shape = 'u8[8192]{0}', space=vmem, size = 0x2000, scoped, tag = 'output window, operand 0']
    #allocation6 [shape = 's32[2]{0}', space=sflag, size = 0x8, scoped, tag = 'scoped memory for tpu_custom_call.1']
    %16 = vsyncpa [#allocation6], 0
    %s17 = scalar_lea.sflag [#allocation6], 1
    %18 = vsyncpa %s17, 0
    loop: start=0, step=1, limit=4
    $region2: #{tpu_custom_call.1} parent=1 // loop_pre_header
      _
    $region3: #{tpu_custom_call.1} parent=1 // loop_header
      %s20 = sphi 0, %s24
      %p21 = scmp.ge.s32.totalorder %s20, 4
      %s30 = sphi 0, %s32
      %s33 = sphi 0, %s30
      %s34 = sphi 0, %s33
      %s50 = sphi 0, %s34
      %s56 = sphi 0, %s58
      %s59 = sphi 0, %s56
      %s60 = sphi 0, %s59
      %s76 = sphi 0, %s60
      %s80 = sphi 0, %s80
      %s82 = sphi 0, %s80
      %s83 = sphi 0, %s82
      %s97 = sphi 0, %s83
      %s103 = sphi 0, %s105
      %s106 = sphi 0, %s103
      %s107 = sphi 0, %s106
      %s123 = sphi 0, %s107
      %s129 = sphi 0, %s131
      %s132 = sphi 0, %s129
      %s133 = sphi 0, %s132
      %s149 = sphi 0, %s133
    $region4: #{tpu_custom_call.1} parent=1 // loop_header_branch
      %23 = sbr.rel (%p21) target = $region8
    $region5: #{tpu_custom_call.1} parent=1 // loop_body
      %s25 = ssub.s32 %s20, 1
      %s26 = ssub.s32 %s20, 2
      %s27 = sadd.s32 %s20, 1
      %s28 = ssub.s32 %s20, %s27
      %p29 = scmp.eq.s32.totalorder %s28, 0
      %s31 = sadd.s32 %s30, 1
      %s32 = scalar_select %p29, %s30, %s31
      %p35 = pneg %p29
      %p36 = scmp.eq.s32.totalorder %s20, 1
      %p37 = por %p35, %p36
      %p38 = scmp.ne.s32.totalorder %s30, %s33
      %p39 = scmp.eq.s32.totalorder %s20, 0
      %p40 = por %p38, %p39
      %p41 = scmp.ne.s32.totalorder %s30, %s33
      %p42 = scmp.eq.s32.totalorder %s25, 1
      %p43 = por %p41, %p42
      %p44 = scmp.ne.s32.totalorder %s33, %s34
      %p45 = scmp.eq.s32.totalorder %s25, 0
      %p46 = por %p44, %p45
      %p47 = scmp.ne.s32.totalorder %s33, %s34
      %p48 = scmp.eq.s32.totalorder %s26, 1
      %p49 = por %p47, %p48
      %p51 = scmp.ne.s32.totalorder %s34, %s50
      %p52 = scmp.eq.s32.totalorder %s26, 0
      %p53 = por %p51, %p52
      %s54 = ssub.s32 %s20, %s27
      %p55 = scmp.eq.s32.totalorder %s54, 0
      %s57 = sadd.s32 %s56, 1
      %s58 = scalar_select %p55, %s56, %s57
      %p61 = pneg %p55
      %p62 = scmp.eq.s32.totalorder %s20, 1
      %p63 = por %p61, %p62
      %p64 = scmp.ne.s32.totalorder %s56, %s59
      %p65 = scmp.eq.s32.totalorder %s20, 0
      %p66 = por %p64, %p65
      %p67 = scmp.ne.s32.totalorder %s56, %s59
      %p68 = scmp.eq.s32.totalorder %s25, 1
      %p69 = por %p67, %p68
      %p70 = scmp.ne.s32.totalorder %s59, %s60
      %p71 = scmp.eq.s32.totalorder %s25, 0
      %p72 = por %p70, %p71
      %p73 = scmp.ne.s32.totalorder %s59, %s60
      %p74 = scmp.eq.s32.totalorder %s26, 1
      %p75 = por %p73, %p74
      %p77 = scmp.ne.s32.totalorder %s60, %s76
      %p78 = scmp.eq.s32.totalorder %s26, 0
      %p79 = por %p77, %p78
      %s81 = sadd.s32 %s80, 1
      %p84 = scmp.eq.s32.totalorder %s20, 1
      %p85 = scmp.ne.s32.totalorder %s80, %s82
      %p86 = scmp.eq.s32.totalorder %s20, 0
      %p87 = por %p85, %p86
      %p88 = scmp.ne.s32.totalorder %s80, %s82
      %p89 = scmp.eq.s32.totalorder %s25, 1
      %p90 = por %p88, %p89
      %p91 = scmp.ne.s32.totalorder %s82, %s83
      %p92 = scmp.eq.s32.totalorder %s25, 0
      %p93 = por %p91, %p92
      %p94 = scmp.ne.s32.totalorder %s82, %s83
      %p95 = scmp.eq.s32.totalorder %s26, 1
      %p96 = por %p94, %p95
      %p98 = scmp.ne.s32.totalorder %s83, %s97
      %p99 = scmp.eq.s32.totalorder %s26, 0
      %p100 = por %p98, %p99
      %s101 = ssub.s32 %s20, %s27
      %p102 = scmp.eq.s32.totalorder %s101, 0
      %s104 = sadd.s32 %s103, 1
      %s105 = scalar_select %p102, %s103, %s104
      %p108 = pneg %p102
      %p109 = scmp.eq.s32.totalorder %s20, 1
      %p110 = por %p108, %p109
      %p111 = scmp.ne.s32.totalorder %s103, %s106
      %p112 = scmp.eq.s32.totalorder %s20, 0
      %p113 = por %p111, %p112
      %p114 = scmp.ne.s32.totalorder %s103, %s106
      %p115 = scmp.eq.s32.totalorder %s25, 1
      %p116 = por %p114, %p115
      %p117 = scmp.ne.s32.totalorder %s106, %s107
      %p118 = scmp.eq.s32.totalorder %s25, 0
      %p119 = por %p117, %p118
      %p120 = scmp.ne.s32.totalorder %s106, %s107
      %p121 = scmp.eq.s32.totalorder %s26, 1
      %p122 = por %p120, %p121
      %p124 = scmp.ne.s32.totalorder %s107, %s123
      %p125 = scmp.eq.s32.totalorder %s26, 0
      %p126 = por %p124, %p125
      %s127 = ssub.s32 %s20, %s27
      %p128 = scmp.eq.s32.totalorder %s127, 0
      %s130 = sadd.s32 %s129, 1
      %s131 = scalar_select %p128, %s129, %s130
      %p134 = pneg %p128
      %p135 = scmp.eq.s32.totalorder %s20, 1
      %p136 = por %p134, %p135
      %p137 = scmp.ne.s32.totalorder %s129, %s132
      %p138 = scmp.eq.s32.totalorder %s20, 0
      %p139 = por %p137, %p138
      %p140 = scmp.ne.s32.totalorder %s129, %s132
      %p141 = scmp.eq.s32.totalorder %s25, 1
      %p142 = por %p140, %p141
      %p143 = scmp.ne.s32.totalorder %s132, %s133
      %p144 = scmp.eq.s32.totalorder %s25, 0
      %p145 = por %p143, %p144
      %p146 = scmp.ne.s32.totalorder %s132, %s133
      %p147 = scmp.eq.s32.totalorder %s26, 1
      %p148 = por %p146, %p147
      %p150 = scmp.ne.s32.totalorder %s133, %s149
      %p151 = scmp.eq.s32.totalorder %s26, 0
      %p152 = por %p150, %p151
      %p153 = scmp.le.s32.totalorder 1, %s20
      %p154 = scmp.lt.s32.totalorder %s20, 3
      %p155 = pnand %p153, %p154
      %p156 = pneg %p155
      // Predicated region
      $region9: #{tpu_custom_call.1} parent=5 // pred_check
        _
      $region10: #{tpu_custom_call.1} parent=5 // pred_check_branch
        %158 = sbr.rel (%p155) target = $region12
      $region11: #{tpu_custom_call.1} parent=5 // pred_region
        %s159 = ssub.s32 %s20, 1
        // Predicated region
        $region13: #{tpu_custom_call.1} parent=11 // pred_check
          %p160 = pneg %p93
        $region14: #{tpu_custom_call.1} parent=11 // pred_check_branch
          %162 = sbr.rel (%p160) target = $region16
        $region15: #{tpu_custom_call.1} parent=11 // pred_region
          _
        $region16: #{tpu_custom_call.1} parent=11 // pred_fallthru
          _
      $region12: #{tpu_custom_call.1} parent=5 // pred_fallthru
        _
      %p163 = scmp.lt.s32.totalorder %s20, 2
      // Predicated region
      $region17: #{tpu_custom_call.1} parent=5 // pred_check
        %p164 = pneg %p163
      $region18: #{tpu_custom_call.1} parent=5 // pred_check_branch
        %166 = sbr.rel (%p164) target = $region20
      $region19: #{tpu_custom_call.1} parent=5 // pred_region
        // Predicated region
        $region21: #{tpu_custom_call.1} parent=19 // pred_check
          %p167 = pneg %p40
        $region22: #{tpu_custom_call.1} parent=19 // pred_check_branch
          %169 = sbr.rel (%p167) target = $region24
        $region23: #{tpu_custom_call.1} parent=19 // pred_region
          %p170 = scmp.lt.s32.totalorder %s20, 1
          %s171 = scalar_select %p170, %s20, 1
          %s172 = smul.addr %s171, 8
          %s173 = scalar_lea.vmem %s1, %s172
        $region24: #{tpu_custom_call.1} parent=19 // pred_fallthru
          _
        // Predicated region
        $region25: #{tpu_custom_call.1} parent=19 // pred_check
          %p174 = pneg %p66
        $region26: #{tpu_custom_call.1} parent=19 // pred_check_branch
          %176 = sbr.rel (%p174) target = $region28
        $region27: #{tpu_custom_call.1} parent=19 // pred_region
          %p177 = scmp.lt.s32.totalorder %s20, 1
          %s178 = scalar_select %p177, %s20, 1
          %s179 = smul.addr %s178, 8
          %s180 = scalar_lea.vmem %s2, %s179
        $region28: #{tpu_custom_call.1} parent=19 // pred_fallthru
          _
        // Predicated region
        $region29: #{tpu_custom_call.1} parent=19 // pred_check
          %p181 = pneg %p113
        $region30: #{tpu_custom_call.1} parent=19 // pred_check_branch
          %183 = sbr.rel (%p181) target = $region32
        $region31: #{tpu_custom_call.1} parent=19 // pred_region
          %s184 = sand.u32 %s103, 1
          %s185 = sand.u32 %s103, 1
          %s186 = smul.addr %s185, 16
          %s187 = scalar_lea.vmem [#allocation4], %s186
          %s188 = smul.addr %s20, 8
          %s189 = scalar_lea.vmem %s4, %s188
          // Predicated region
          $region33: #{tpu_custom_call.1} parent=31 // pred_check
            _
          $region34: #{tpu_custom_call.1} parent=31 // pred_check_branch
            %191 = sbr.rel (0) target = $region36
          $region35: #{tpu_custom_call.1} parent=31 // pred_region
            // Predicated region
            $region37: #{tpu_custom_call.1} parent=35 // pred_check
              _
            $region38: #{tpu_custom_call.1} parent=35 // pred_check_branch
              %193 = sbr.rel (0) target = $region40
            $region39: #{tpu_custom_call.1} parent=35 // pred_region
              // Predicated region
              $region52: #{tpu_custom_call.1} parent=39 // pred_check
                _
              $region53: #{tpu_custom_call.1} parent=39 // pred_check_branch
                %211 = sbr.rel (0) target = $region55
              $region54: #{tpu_custom_call.1} parent=39 // pred_region
                loop: start=0, step=1, limit=1
                $region56: #{tpu_custom_call.1} parent=54 // loop_pre_header
                  _
                $region57: #{tpu_custom_call.1} parent=54 // loop_header
                  %s213 = sphi 0, %s217
                  %p214 = scmp.ge.s32.totalorder %s213, 1
                  %s218 = sphi %s189, %s189
                  %s219 = sphi %s187, %s187
                $region58: #{tpu_custom_call.1} parent=54 // loop_header_branch
                  %216 = sbr.rel (%p214) target = $region62
                $region59: #{tpu_custom_call.1} parent=54 // loop_body
                  %v220 = vld [vmem:[%s218] sm:$0xff]
                  %221 = vst [vmem:[%s219] sm:$0xff] %v220
                  %v222 = vld [vmem:[%s218 + $0x10] sm:$0xff]
                  %223 = vst [vmem:[%s219 + $0x8] sm:$0xff] %v222
                $region60: #{tpu_custom_call.1} parent=54 // loop_footer
                  %s217 = sadd.s32 1, %s213
                $region61: #{tpu_custom_call.1} parent=54 // loop_footer_branch
                  %212 = sbr.rel target = $region57
                $region62: #{tpu_custom_call.1} parent=54 // loop_exit
                  _
              $region55: #{tpu_custom_call.1} parent=39 // pred_fallthru
                _
              // Predicated region
              $region63: #{tpu_custom_call.1} parent=39 // pred_check
                _
              $region64: #{tpu_custom_call.1} parent=39 // pred_check_branch
                %225 = sbr.rel target = $region66
              $region65: #{tpu_custom_call.1} parent=39 // pred_region
                _
              $region66: #{tpu_custom_call.1} parent=39 // pred_fallthru
                _
            $region40: #{tpu_custom_call.1} parent=35 // pred_fallthru
              _
            // Predicated region
            $region41: #{tpu_custom_call.1} parent=35 // pred_check
              _
            $region42: #{tpu_custom_call.1} parent=35 // pred_check_branch
              %195 = sbr.rel target = $region44
            $region43: #{tpu_custom_call.1} parent=35 // pred_region
              %s197 = ssub.s32 256, 1
              loop: start=0, step=1, limit=1
              $region45: #{tpu_custom_call.1} parent=43 // loop_pre_header
                _
              $region46: #{tpu_custom_call.1} parent=43 // loop_header
                %s199 = sphi 0, %s203
                %p200 = scmp.ge.s32.totalorder %s199, 1
                %s204 = sphi %s189, %s189
                %s205 = sphi %s187, %s187
              $region47: #{tpu_custom_call.1} parent=43 // loop_header_branch
                %202 = sbr.rel (%p200) target = $region51
              $region48: #{tpu_custom_call.1} parent=43 // loop_body
                %v206 = vld [vmem:[%s204] sm:%s197]
                %207 = vst [vmem:[%s205] sm:%s197] %v206
                %v208 = vld [vmem:[%s204 + $0x10] sm:%s197]
                %209 = vst [vmem:[%s205 + $0x8] sm:%s197] %v208
              $region49: #{tpu_custom_call.1} parent=43 // loop_footer
                %s203 = sadd.s32 1, %s199
              $region50: #{tpu_custom_call.1} parent=43 // loop_footer_branch
                %198 = sbr.rel target = $region46
              $region51: #{tpu_custom_call.1} parent=43 // loop_exit
                _
            $region44: #{tpu_custom_call.1} parent=35 // pred_fallthru
              _
          $region36: #{tpu_custom_call.1} parent=31 // pred_fallthru
            _
          %226 = vnop
        $region32: #{tpu_custom_call.1} parent=19 // pred_fallthru
          _
      $region20: #{tpu_custom_call.1} parent=5 // pred_fallthru
        _
      %p227 = scmp.le.s32.totalorder 1, %s20
      %p228 = scmp.lt.s32.totalorder %s20, 3
      %p229 = pnand %p227, %p228
      %p230 = pneg %p229
      // Predicated region
      $region67: #{tpu_custom_call.1} parent=5 // pred_check
        _
      $region68: #{tpu_custom_call.1} parent=5 // pred_check_branch
        %232 = sbr.rel (%p229) target = $region70
      $region69: #{tpu_custom_call.1} parent=5 // pred_region
        %s233 = ssub.s32 %s20, 1
        %s234 = sand.u32 %s106, 1
        %s235 = sand.u32 %s106, 1
        %s236 = smul.addr %s235, 16
        %s237 = scalar_lea.vmem [#allocation4], %s236
        // Predicated region
        $region71: #{tpu_custom_call.1} parent=69 // pred_check
          %p238 = pneg %p119
        $region72: #{tpu_custom_call.1} parent=69 // pred_check_branch
          %240 = sbr.rel (%p238) target = $region74
        $region73: #{tpu_custom_call.1} parent=69 // pred_region
          _
        $region74: #{tpu_custom_call.1} parent=69 // pred_fallthru
          _
        %p241 = scmp.lt.s32.totalorder %s25, 1
        %s242 = scalar_select %p241, %s25, 1
        %s243 = smul.addr %s242, 8
        %s244 = scalar_lea.vmem %s1, %s243
        %p245 = pneg %p46
        %p246 = pneg %p43
        %p247 = scmp.lt.s32.totalorder %s25, 1
        %s248 = scalar_select %p247, %s25, 1
        %s249 = smul.addr %s248, 8
        %s250 = scalar_lea.vmem %s2, %s249
        %p251 = pneg %p72
        %p252 = pneg %p69
        %p253 = pneg %p93
        %p254 = pneg %p90
        %s255 = sand.u32 %s106, 1
        %s256 = sand.u32 %s106, 1
        %s257 = smul.addr %s256, 16
        %s258 = scalar_lea.vmem [#allocation4], %s257
        %p259 = pneg %p119
        %p260 = pneg %p116
        %p261 = pneg %p145
        %p262 = pneg %p142
        %s263 = sand.u32 %s132, 1
        %s264 = scalar_lea.sflag [#allocation6], %s263
        %s265 = sand.u32 %s132, 1
        %s266 = smul.addr %s265, 8
        %s267 = scalar_lea.vmem [#allocation5], %s266
        %p268 = scmp.lt.s32.totalorder %s25, 1
        %s269 = scalar_select %p268, %s25, 1
        %s270 = smul.addr %s269, 8
        %s271 = scalar_lea.vmem %s1, %s270
        %p272 = scmp.lt.s32.totalorder %s25, 1
        %s273 = scalar_select %p272, %s25, 1
        %s274 = smul.addr %s273, 8
        %s275 = scalar_lea.vmem %s2, %s274
        %v276 = vld [vmem:[%s271] sm:$0xff]
        %v277 = vld [vmem:[%s275] sm:$0xff]
        %s278 = sld [smem:[#allocation3 + %s25]]
        %v279 = vlaneseq
        %v280 = vand.u32 %v279, 127
        %v281 = vstv %s278
        %vm282 = vcmp.lt.s32.totalorder %v280, %v281
        %v283 = vld [vmem:[%s3] sm:$0xff]
        %v284 = vld [vmem:[%s3 + $0x8] sm:$0xff]
        %v285 = vld [vmem:[%s3 + $0x10] sm:$0xff]
        %v286 = vld [vmem:[%s3 + $0x18] sm:$0xff]
        %v287 = vld [vmem:[%s3 + $0x20] sm:$0xff]
        %v288 = vld [vmem:[%s3 + $0x28] sm:$0xff]
        %v289 = vld [vmem:[%s3 + $0x30] sm:$0xff]
        %v290 = vld [vmem:[%s3 + $0x38] sm:$0xff]
        %v291 = vld [vmem:[%s3 + $0x40] sm:$0xff]
        %v292 = vld [vmem:[%s3 + $0x48] sm:$0xff]
        %v293 = vld [vmem:[%s3 + $0x50] sm:$0xff]
        %v294 = vld [vmem:[%s3 + $0x58] sm:$0xff]
        %v295 = vld [vmem:[%s3 + $0x60] sm:$0xff]
        %v296 = vld [vmem:[%s3 + $0x68] sm:$0xff]
        %v297 = vld [vmem:[%s3 + $0x70] sm:$0xff]
        %v298 = vld [vmem:[%s3 + $0x78] sm:$0xff]
        %v299 = vld [vmem:[%s237] sm:$0xff]
        %300 = vmatprep.subr.mxu0 0.0
        %301 = vmatpush1.msra.mxu0 %v298
        %302 = vmatprep.subr.mxu0 0.0
        %303 = vmatpush1.msra.mxu0 %v297
        %304 = vmatprep.subr.mxu0 0.0
        %305 = vmatpush1.msra.mxu0 %v296
        %306 = vmatprep.subr.mxu0 0.0
        %307 = vmatpush1.msra.mxu0 %v295
        %308 = vmatprep.subr.mxu0 0.0
        %309 = vmatpush1.msra.mxu0 %v294
        %310 = vmatprep.subr.mxu0 0.0
        %311 = vmatpush1.msra.mxu0 %v293
        %312 = vmatprep.subr.mxu0 0.0
        %313 = vmatpush1.msra.mxu0 %v292
        %314 = vmatprep.subr.mxu0 0.0
        %315 = vmatpush1.msra.mxu0 %v291
        %316 = vmatprep.subr.mxu0 0.0
        %317 = vmatpush1.msra.mxu0 %v290
        %318 = vmatprep.subr.mxu0 0.0
        %319 = vmatpush1.msra.mxu0 %v289
        %320 = vmatprep.subr.mxu0 0.0
        %321 = vmatpush1.msra.mxu0 %v288
        %322 = vmatprep.subr.mxu0 0.0
        %323 = vmatpush1.msra.mxu0 %v287
        %324 = vmatprep.subr.mxu0 0.0
        %325 = vmatpush1.msra.mxu0 %v286
        %326 = vmatprep.subr.mxu0 0.0
        %327 = vmatpush1.msra.mxu0 %v285
        %328 = vmatprep.subr.mxu0 0.0
        %329 = vmatpush1.msra.mxu0 %v284
        %330 = vmatprep.subr.mxu0 0.0
        %331 = vmatpush1.msra.mxu0 %v283
        %332 = vmatprep.subr.mxu0 0.0
        %333 = vmatpush2.msra.mxu0 0.0
        %334 = vmatprep.subr.mxu0 0.0
        %335 = vmatpush2.msra.mxu0 0.0
        %336 = vmatprep.subr.mxu0 0.0
        %337 = vmatpush2.msra.mxu0 0.0
        %338 = vmatprep.subr.mxu0 0.0
        %339 = vmatpush2.msra.mxu0 0.0
        %340 = vmatprep.subr.mxu0 0.0
        %341 = vmatpush2.msra.mxu0 0.0
        %342 = vmatprep.subr.mxu0 0.0
        %343 = vmatpush2.msra.mxu0 0.0
        %344 = vmatprep.subr.mxu0 0.0
        %345 = vmatpush2.msra.mxu0 0.0
        %346 = vmatprep.subr.mxu0 0.0
        %347 = vmatpush2.msra.mxu0 0.0
        %348 = vmatprep.subr.mxu0 0.0
        %349 = vmatpush2.msra.mxu0 0.0
        %350 = vmatprep.subr.mxu0 0.0
        %351 = vmatpush2.msra.mxu0 0.0
        %352 = vmatprep.subr.mxu0 0.0
        %353 = vmatpush2.msra.mxu0 0.0
        %354 = vmatprep.subr.mxu0 0.0
        %355 = vmatpush2.msra.mxu0 0.0
        %356 = vmatprep.subr.mxu0 0.0
        %357 = vmatpush2.msra.mxu0 0.0
        %358 = vmatprep.subr.mxu0 0.0
        %359 = vmatpush2.msra.mxu0 0.0
        %360 = vmatprep.subr.mxu0 0.0
        %361 = vmatpush2.msra.mxu0 0.0
        %362 = vmatprep.subr.mxu0 0.0
        %363 = vmatpush2.msra.mxu0 0.0
        %364 = vmatprep.mubr.f32.mxu0 0.0
        %365 = vmatmul.mubr.f32.gmra.mxu0 %v276
        %v366 = vpop.f32.mrf.mxu0
        %v367 = vadd.f32 0.0, %v366
        %v368 = vpop.f32.mrf.mxu0
        %369 = vdwg.mxu0
        %vm370 = vcmp.eq.s32.totalorder %v299, 0
        %372 = vset.pattern.permute.xlu0 0
        %373 = vperm.xlu0 %372, %v367
        %v374 = vpop.permute.xlu0 %373
        %v376 = vsel %vm370, %v374, 0.0
        %v377 = vadd.f32 %v376, 0.0
        %vm378 = vcmp.eq.s32.totalorder %v299, 1
        %379 = vset.pattern.permute.xlu0 1
        %380 = vperm.xlu0 %379, %v367
        %v381 = vpop.permute.xlu0 %380
        %v383 = vsel %vm378, %v381, 0.0
        %v384 = vadd.f32 %v377, %v383
        %vm385 = vcmp.eq.s32.totalorder %v299, 2
        %386 = vset.pattern.permute.xlu0 2
        %387 = vperm.xlu0 %386, %v367
        %v388 = vpop.permute.xlu0 %387
        %v390 = vsel %vm385, %v388, 0.0
        %v391 = vadd.f32 %v384, %v390
        %vm392 = vcmp.eq.s32.totalorder %v299, 3
        %393 = vset.pattern.permute.xlu0 3
        %394 = vperm.xlu0 %393, %v367
        %v395 = vpop.permute.xlu0 %394
        %v397 = vsel %vm392, %v395, 0.0
        %v398 = vadd.f32 %v391, %v397
        %vm399 = vcmp.eq.s32.totalorder %v299, 4
        %400 = vset.pattern.permute.xlu0 4
        %401 = vperm.xlu0 %400, %v367
        %v402 = vpop.permute.xlu0 %401
        %v404 = vsel %vm399, %v402, 0.0
        %v405 = vadd.f32 %v398, %v404
        %vm406 = vcmp.eq.s32.totalorder %v299, 5
        %407 = vset.pattern.permute.xlu0 5
        %408 = vperm.xlu0 %407, %v367
        %v409 = vpop.permute.xlu0 %408
        %v411 = vsel %vm406, %v409, 0.0
        %v412 = vadd.f32 %v405, %v411
        %vm413 = vcmp.eq.s32.totalorder %v299, 6
        %414 = vset.pattern.permute.xlu0 6
        %415 = vperm.xlu0 %414, %v367
        %v416 = vpop.permute.xlu0 %415
        %v418 = vsel %vm413, %v416, 0.0
        %v419 = vadd.f32 %v412, %v418
        %vm420 = vcmp.eq.s32.totalorder %v299, 7
        %421 = vset.pattern.permute.xlu0 7
        %422 = vperm.xlu0 %421, %v367
        %v423 = vpop.permute.xlu0 %422
        %v425 = vsel %vm420, %v423, 0.0
        %v426 = vadd.f32 %v419, %v425
        %427 = vxpose.xlu0.b32.start [1/16] %v426, 128
        %428 = vxpose.xlu0.b32.cont [2/16] 0.0, 128
        %429 = vxpose.xlu0.b32.cont [3/16] 0.0, 128
        %430 = vxpose.xlu0.b32.cont [4/16] 0.0, 128
        %431 = vxpose.xlu0.b32.cont [5/16] 0.0, 128
        %432 = vxpose.xlu0.b32.cont [6/16] 0.0, 128
        %433 = vxpose.xlu0.b32.cont [7/16] 0.0, 128
        %434 = vxpose.xlu0.b32.cont [8/16] 0.0, 128
        %435 = vxpose.xlu0.b32.cont [9/16] 0.0, 128
        %436 = vxpose.xlu0.b32.cont [10/16] 0.0, 128
        %437 = vxpose.xlu0.b32.cont [11/16] 0.0, 128
        %438 = vxpose.xlu0.b32.cont [12/16] 0.0, 128
        %439 = vxpose.xlu0.b32.cont [13/16] 0.0, 128
        %440 = vxpose.xlu0.b32.cont [14/16] 0.0, 128
        %441 = vxpose.xlu0.b32.cont [15/16] 0.0, 128
        %442 = vxpose.xlu0.b32.end [16/16] 0.0, 128
        %v443 = vpop.trf.xlu0
        %v444 = vpop.trf.xlu0
        %v445 = vpop.trf.xlu0
        %v446 = vpop.trf.xlu0
        %v447 = vpop.trf.xlu0
        %v448 = vpop.trf.xlu0
        %v449 = vpop.trf.xlu0
        %v450 = vpop.trf.xlu0
        %v451 = vpop.trf.xlu0
        %v452 = vpop.trf.xlu0
        %v453 = vpop.trf.xlu0
        %v454 = vpop.trf.xlu0
        %v455 = vpop.trf.xlu0
        %v456 = vpop.trf.xlu0
        %v457 = vpop.trf.xlu0
        %v458 = vpop.trf.xlu0
        %v459 = vsel %vm282, %v443, -1e+18
        %vm460 = vcmask 64512
        %v461 = vsel %vm460, %v459, -inf
        %462 = vmax.xlane.f32.xlu0 %v461
        %v463 = vpop.xlane.xlu0 %462
        %v464 = vsub.f32 %v459, %v463
        %v465 = vmul.f32 %v464, 1.442695
        %v466 = vpow.pop %v465
        %v467 = vsel %vm460, %v466, 0.0
        %468 = vadd.xlane.f32.xlu0 %v467
        %v469 = vpop.xlane.xlu0 %468
        %v470 = vrcp.pop %v469
        %v471 = vmul.f32 %v466, %v470
        %s472 = scalar_lea.vmem %s3, 128
        %v473 = vld [vmem:[%s472] sm:$0xff]
        %v474 = vld [vmem:[%s472 + $0x8] sm:$0xff]
        %v475 = vld [vmem:[%s472 + $0x10] sm:$0xff]
        %v476 = vld [vmem:[%s472 + $0x18] sm:$0xff]
        %v477 = vld [vmem:[%s472 + $0x20] sm:$0xff]
        %v478 = vld [vmem:[%s472 + $0x28] sm:$0xff]
        %v479 = vld [vmem:[%s472 + $0x30] sm:$0xff]
        %v480 = vld [vmem:[%s472 + $0x38] sm:$0xff]
        %v481 = vld [vmem:[%s472 + $0x40] sm:$0xff]
        %v482 = vld [vmem:[%s472 + $0x48] sm:$0xff]
        %v483 = vld [vmem:[%s472 + $0x50] sm:$0xff]
        %v484 = vld [vmem:[%s472 + $0x58] sm:$0xff]
        %v485 = vld [vmem:[%s472 + $0x60] sm:$0xff]
        %v486 = vld [vmem:[%s472 + $0x68] sm:$0xff]
        %v487 = vld [vmem:[%s472 + $0x70] sm:$0xff]
        %v488 = vld [vmem:[%s472 + $0x78] sm:$0xff]
        %s489 = scalar_lea.vmem %s237, 8 [#allocation4]
        %v490 = vld [vmem:[%s489] sm:$0xff]
        %491 = vmatprep.subr.mxu0 0.0
        %492 = vmatpush1.msra.mxu0 %v488
        %493 = vmatprep.subr.mxu0 0.0
        %494 = vmatpush1.msra.mxu0 %v487
        %495 = vmatprep.subr.mxu0 0.0
        %496 = vmatpush1.msra.mxu0 %v486
        %497 = vmatprep.subr.mxu0 0.0
        %498 = vmatpush1.msra.mxu0 %v485
        %499 = vmatprep.subr.mxu0 0.0
        %500 = vmatpush1.msra.mxu0 %v484
        %501 = vmatprep.subr.mxu0 0.0
        %502 = vmatpush1.msra.mxu0 %v483
        %503 = vmatprep.subr.mxu0 0.0
        %504 = vmatpush1.msra.mxu0 %v482
        %505 = vmatprep.subr.mxu0 0.0
        %506 = vmatpush1.msra.mxu0 %v481
        %507 = vmatprep.subr.mxu0 0.0
        %508 = vmatpush1.msra.mxu0 %v480
        %509 = vmatprep.subr.mxu0 0.0
        %510 = vmatpush1.msra.mxu0 %v479
        %511 = vmatprep.subr.mxu0 0.0
        %512 = vmatpush1.msra.mxu0 %v478
        %513 = vmatprep.subr.mxu0 0.0
        %514 = vmatpush1.msra.mxu0 %v477
        %515 = vmatprep.subr.mxu0 0.0
        %516 = vmatpush1.msra.mxu0 %v476
        %517 = vmatprep.subr.mxu0 0.0
        %518 = vmatpush1.msra.mxu0 %v475
        %519 = vmatprep.subr.mxu0 0.0
        %520 = vmatpush1.msra.mxu0 %v474
        %521 = vmatprep.subr.mxu0 0.0
        %522 = vmatpush1.msra.mxu0 %v473
        %523 = vmatprep.subr.mxu0 0.0
        %524 = vmatpush2.msra.mxu0 0.0
        %525 = vmatprep.subr.mxu0 0.0
        %526 = vmatpush2.msra.mxu0 0.0
        %527 = vmatprep.subr.mxu0 0.0
        %528 = vmatpush2.msra.mxu0 0.0
        %529 = vmatprep.subr.mxu0 0.0
        %530 = vmatpush2.msra.mxu0 0.0
        %531 = vmatprep.subr.mxu0 0.0
        %532 = vmatpush2.msra.mxu0 0.0
        %533 = vmatprep.subr.mxu0 0.0
        %534 = vmatpush2.msra.mxu0 0.0
        %535 = vmatprep.subr.mxu0 0.0
        %536 = vmatpush2.msra.mxu0 0.0
        %537 = vmatprep.subr.mxu0 0.0
        %538 = vmatpush2.msra.mxu0 0.0
        %539 = vmatprep.subr.mxu0 0.0
        %540 = vmatpush2.msra.mxu0 0.0
        %541 = vmatprep.subr.mxu0 0.0
        %542 = vmatpush2.msra.mxu0 0.0
        %543 = vmatprep.subr.mxu0 0.0
        %544 = vmatpush2.msra.mxu0 0.0
        %545 = vmatprep.subr.mxu0 0.0
        %546 = vmatpush2.msra.mxu0 0.0
        %547 = vmatprep.subr.mxu0 0.0
        %548 = vmatpush2.msra.mxu0 0.0
        %549 = vmatprep.subr.mxu0 0.0
        %550 = vmatpush2.msra.mxu0 0.0
        %551 = vmatprep.subr.mxu0 0.0
        %552 = vmatpush2.msra.mxu0 0.0
        %553 = vmatprep.subr.mxu0 0.0
        %554 = vmatpush2.msra.mxu0 0.0
        %555 = vmatprep.mubr.f32.mxu0 0.0
        %556 = vmatmul.mubr.f32.gmra.mxu0 %v276
        %v557 = vpop.f32.mrf.mxu0
        %v558 = vadd.f32 0.0, %v557
        %v559 = vpop.f32.mrf.mxu0
        %560 = vdwg.mxu0
        %vm561 = vcmp.eq.s32.totalorder %v490, 0
        %563 = vset.pattern.permute.xlu0 0
        %564 = vperm.xlu0 %563, %v558
        %v565 = vpop.permute.xlu0 %564
        %v567 = vsel %vm561, %v565, 0.0
        %v568 = vadd.f32 %v567, 0.0
        %vm569 = vcmp.eq.s32.totalorder %v490, 1
        %570 = vset.pattern.permute.xlu0 1
        %571 = vperm.xlu0 %570, %v558
        %v572 = vpop.permute.xlu0 %571
        %v574 = vsel %vm569, %v572, 0.0
        %v575 = vadd.f32 %v568, %v574
        %vm576 = vcmp.eq.s32.totalorder %v490, 2
        %577 = vset.pattern.permute.xlu0 2
        %578 = vperm.xlu0 %577, %v558
        %v579 = vpop.permute.xlu0 %578
        %v581 = vsel %vm576, %v579, 0.0
        %v582 = vadd.f32 %v575, %v581
        %vm583 = vcmp.eq.s32.totalorder %v490, 3
        %584 = vset.pattern.permute.xlu0 3
        %585 = vperm.xlu0 %584, %v558
        %v586 = vpop.permute.xlu0 %585
        %v588 = vsel %vm583, %v586, 0.0
        %v589 = vadd.f32 %v582, %v588
        %vm590 = vcmp.eq.s32.totalorder %v490, 4
        %591 = vset.pattern.permute.xlu0 4
        %592 = vperm.xlu0 %591, %v558
        %v593 = vpop.permute.xlu0 %592
        %v595 = vsel %vm590, %v593, 0.0
        %v596 = vadd.f32 %v589, %v595
        %vm597 = vcmp.eq.s32.totalorder %v490, 5
        %598 = vset.pattern.permute.xlu0 5
        %599 = vperm.xlu0 %598, %v558
        %v600 = vpop.permute.xlu0 %599
        %v602 = vsel %vm597, %v600, 0.0
        %v603 = vadd.f32 %v596, %v602
        %vm604 = vcmp.eq.s32.totalorder %v490, 6
        %605 = vset.pattern.permute.xlu0 6
        %606 = vperm.xlu0 %605, %v558
        %v607 = vpop.permute.xlu0 %606
        %v609 = vsel %vm604, %v607, 0.0
        %v610 = vadd.f32 %v603, %v609
        %vm611 = vcmp.eq.s32.totalorder %v490, 7
        %612 = vset.pattern.permute.xlu0 7
        %613 = vperm.xlu0 %612, %v558
        %v614 = vpop.permute.xlu0 %613
        %v616 = vsel %vm611, %v614, 0.0
        %v617 = vadd.f32 %v610, %v616
        %618 = vxpose.xlu0.b32.start [1/16] %v617, 128
        %619 = vxpose.xlu0.b32.cont [2/16] 0.0, 128
        %620 = vxpose.xlu0.b32.cont [3/16] 0.0, 128
        %621 = vxpose.xlu0.b32.cont [4/16] 0.0, 128
        %622 = vxpose.xlu0.b32.cont [5/16] 0.0, 128
        %623 = vxpose.xlu0.b32.cont [6/16] 0.0, 128
        %624 = vxpose.xlu0.b32.cont [7/16] 0.0, 128
        %625 = vxpose.xlu0.b32.cont [8/16] 0.0, 128
        %626 = vxpose.xlu0.b32.cont [9/16] 0.0, 128
        %627 = vxpose.xlu0.b32.cont [10/16] 0.0, 128
        %628 = vxpose.xlu0.b32.cont [11/16] 0.0, 128
        %629 = vxpose.xlu0.b32.cont [12/16] 0.0, 128
        %630 = vxpose.xlu0.b32.cont [13/16] 0.0, 128
        %631 = vxpose.xlu0.b32.cont [14/16] 0.0, 128
        %632 = vxpose.xlu0.b32.cont [15/16] 0.0, 128
        %633 = vxpose.xlu0.b32.end [16/16] 0.0, 128
        %v634 = vpop.trf.xlu0
        %v635 = vpop.trf.xlu0
        %v636 = vpop.trf.xlu0
        %v637 = vpop.trf.xlu0
        %v638 = vpop.trf.xlu0
        %v639 = vpop.trf.xlu0
        %v640 = vpop.trf.xlu0
        %v641 = vpop.trf.xlu0
        %v642 = vpop.trf.xlu0
        %v643 = vpop.trf.xlu0
        %v644 = vpop.trf.xlu0
        %v645 = vpop.trf.xlu0
        %v646 = vpop.trf.xlu0
        %v647 = vpop.trf.xlu0
        %v648 = vpop.trf.xlu0
        %v649 = vpop.trf.xlu0
        %v650 = vsel %vm282, %v634, -1e+18
        %v651 = vsel %vm460, %v650, -inf
        %652 = vmax.xlane.f32.xlu0 %v651
        %v653 = vpop.xlane.xlu0 %652
        %v654 = vsub.f32 %v650, %v653
        %v655 = vmul.f32 %v654, 1.442695
        %v656 = vpow.pop %v655
        %v657 = vsel %vm460, %v656, 0.0
        %658 = vadd.xlane.f32.xlu0 %v657
        %v659 = vpop.xlane.xlu0 %658
        %v660 = vrcp.pop %v659
        %v661 = vmul.f32 %v656, %v660
        %v663 = vsel %vm460, %v661, 0
        %665 = vmatprep.subr.mxu0 0.0
        %666 = vmatpush1.msra.mxu0 0.0
        %667 = vmatprep.subr.mxu0 0.0
        %668 = vmatpush1.msra.mxu0 0.0
        %669 = vmatprep.subr.mxu0 0.0
        %670 = vmatpush1.msra.mxu0 0.0
        %671 = vmatprep.subr.mxu0 0.0
        %672 = vmatpush1.msra.mxu0 0.0
        %673 = vmatprep.subr.mxu0 0.0
        %674 = vmatpush1.msra.mxu0 0.0
        %675 = vmatprep.subr.mxu0 0.0
        %676 = vmatpush1.msra.mxu0 0.0
        %677 = vmatprep.subr.mxu0 0.0
        %678 = vmatpush1.msra.mxu0 0.0
        %679 = vmatprep.subr.mxu0 0.0
        %680 = vmatpush1.msra.mxu0 0.0
        %681 = vmatprep.subr.mxu0 0.0
        %682 = vmatpush1.msra.mxu0 0.0
        %683 = vmatprep.subr.mxu0 0.0
        %684 = vmatpush1.msra.mxu0 0.0
        %685 = vmatprep.subr.mxu0 0.0
        %686 = vmatpush1.msra.mxu0 0.0
        %687 = vmatprep.subr.mxu0 0.0
        %688 = vmatpush1.msra.mxu0 0.0
        %689 = vmatprep.subr.mxu0 0.0
        %690 = vmatpush1.msra.mxu0 0.0
        %691 = vmatprep.subr.mxu0 0.0
        %692 = vmatpush1.msra.mxu0 0.0
        %693 = vmatprep.subr.mxu0 0.0
        %694 = vmatpush1.msra.mxu0 0.0
        %695 = vmatprep.subr.mxu0 0.0
        %696 = vmatpush1.msra.mxu0 %v277
        %697 = vmatprep.subr.mxu0 0.0
        %698 = vmatpush2.msra.mxu0 0.0
        %699 = vmatprep.subr.mxu0 0.0
        %700 = vmatpush2.msra.mxu0 0.0
        %701 = vmatprep.subr.mxu0 0.0
        %702 = vmatpush2.msra.mxu0 0.0
        %703 = vmatprep.subr.mxu0 0.0
        %704 = vmatpush2.msra.mxu0 0.0
        %705 = vmatprep.subr.mxu0 0.0
        %706 = vmatpush2.msra.mxu0 0.0
        %707 = vmatprep.subr.mxu0 0.0
        %708 = vmatpush2.msra.mxu0 0.0
        %709 = vmatprep.subr.mxu0 0.0
        %710 = vmatpush2.msra.mxu0 0.0
        %711 = vmatprep.subr.mxu0 0.0
        %712 = vmatpush2.msra.mxu0 0.0
        %713 = vmatprep.subr.mxu0 0.0
        %714 = vmatpush2.msra.mxu0 0.0
        %715 = vmatprep.subr.mxu0 0.0
        %716 = vmatpush2.msra.mxu0 0.0
        %717 = vmatprep.subr.mxu0 0.0
        %718 = vmatpush2.msra.mxu0 0.0
        %719 = vmatprep.subr.mxu0 0.0
        %720 = vmatpush2.msra.mxu0 0.0
        %721 = vmatprep.subr.mxu0 0.0
        %722 = vmatpush2.msra.mxu0 0.0
        %723 = vmatprep.subr.mxu0 0.0
        %724 = vmatpush2.msra.mxu0 0.0
        %725 = vmatprep.subr.mxu0 0.0
        %726 = vmatpush2.msra.mxu0 0.0
        %727 = vmatprep.subr.mxu0 0.0
        %728 = vmatpush2.msra.mxu0 0.0
        %729 = vmatprep.mubr.f32.mxu0 0.0
        %730 = vmatmul.mubr.f32.gmra.mxu0 %v663
        %v731 = vpop.f32.mrf.mxu0
        %v732 = vadd.f32 0.0, %v731
        %v733 = vpop.f32.mrf.mxu0
        %734 = vdwg.mxu0
        %v736 = vsel %vm460, %v471, 0
        %738 = vmatprep.subr.mxu0 0.0
        %739 = vmatpush1.msra.mxu0 0.0
        %740 = vmatprep.subr.mxu0 0.0
        %741 = vmatpush1.msra.mxu0 0.0
        %742 = vmatprep.subr.mxu0 0.0
        %743 = vmatpush1.msra.mxu0 0.0
        %744 = vmatprep.subr.mxu0 0.0
        %745 = vmatpush1.msra.mxu0 0.0
        %746 = vmatprep.subr.mxu0 0.0
        %747 = vmatpush1.msra.mxu0 0.0
        %748 = vmatprep.subr.mxu0 0.0
        %749 = vmatpush1.msra.mxu0 0.0
        %750 = vmatprep.subr.mxu0 0.0
        %751 = vmatpush1.msra.mxu0 0.0
        %752 = vmatprep.subr.mxu0 0.0
        %753 = vmatpush1.msra.mxu0 0.0
        %754 = vmatprep.subr.mxu0 0.0
        %755 = vmatpush1.msra.mxu0 0.0
        %756 = vmatprep.subr.mxu0 0.0
        %757 = vmatpush1.msra.mxu0 0.0
        %758 = vmatprep.subr.mxu0 0.0
        %759 = vmatpush1.msra.mxu0 0.0
        %760 = vmatprep.subr.mxu0 0.0
        %761 = vmatpush1.msra.mxu0 0.0
        %762 = vmatprep.subr.mxu0 0.0
        %763 = vmatpush1.msra.mxu0 0.0
        %764 = vmatprep.subr.mxu0 0.0
        %765 = vmatpush1.msra.mxu0 0.0
        %766 = vmatprep.subr.mxu0 0.0
        %767 = vmatpush1.msra.mxu0 0.0
        %768 = vmatprep.subr.mxu0 0.0
        %769 = vmatpush1.msra.mxu0 %v277
        %770 = vmatprep.subr.mxu0 0.0
        %771 = vmatpush2.msra.mxu0 0.0
        %772 = vmatprep.subr.mxu0 0.0
        %773 = vmatpush2.msra.mxu0 0.0
        %774 = vmatprep.subr.mxu0 0.0
        %775 = vmatpush2.msra.mxu0 0.0
        %776 = vmatprep.subr.mxu0 0.0
        %777 = vmatpush2.msra.mxu0 0.0
        %778 = vmatprep.subr.mxu0 0.0
        %779 = vmatpush2.msra.mxu0 0.0
        %780 = vmatprep.subr.mxu0 0.0
        %781 = vmatpush2.msra.mxu0 0.0
        %782 = vmatprep.subr.mxu0 0.0
        %783 = vmatpush2.msra.mxu0 0.0
        %784 = vmatprep.subr.mxu0 0.0
        %785 = vmatpush2.msra.mxu0 0.0
        %786 = vmatprep.subr.mxu0 0.0
        %787 = vmatpush2.msra.mxu0 0.0
        %788 = vmatprep.subr.mxu0 0.0
        %789 = vmatpush2.msra.mxu0 0.0
        %790 = vmatprep.subr.mxu0 0.0
        %791 = vmatpush2.msra.mxu0 0.0
        %792 = vmatprep.subr.mxu0 0.0
        %793 = vmatpush2.msra.mxu0 0.0
        %794 = vmatprep.subr.mxu0 0.0
        %795 = vmatpush2.msra.mxu0 0.0
        %796 = vmatprep.subr.mxu0 0.0
        %797 = vmatpush2.msra.mxu0 0.0
        %798 = vmatprep.subr.mxu0 0.0
        %799 = vmatpush2.msra.mxu0 0.0
        %800 = vmatprep.subr.mxu0 0.0
        %801 = vmatpush2.msra.mxu0 0.0
        %802 = vmatprep.mubr.f32.mxu0 0.0
        %803 = vmatmul.mubr.f32.gmra.mxu0 %v736
        %v804 = vpop.f32.mrf.mxu0
        %v805 = vadd.f32 %v732, %v804
        %v806 = vpop.f32.mrf.mxu0
        %807 = vdwg.mxu0
        %808 = vst [vmem:[%s267] sm:$0xff] %v805
        %s809 = sand.u32 %s132, 1
        %s810 = scalar_lea.sflag [#allocation6], %s809
        %s811 = sand.u32 %s132, 1
        %s812 = smul.addr %s811, 8
        %s813 = scalar_lea.vmem [#allocation5], %s812
        // Predicated region
        $region75: #{tpu_custom_call.1} parent=69 // pred_check
          %p814 = pneg %p142
        $region76: #{tpu_custom_call.1} parent=69 // pred_check_branch
          %816 = sbr.rel (%p814) target = $region78
        $region77: #{tpu_custom_call.1} parent=69 // pred_region
          %s818 = ssub.s32 128, 128
          %819 = vsyncadd %s810, %s818
          %s820 = smul.addr %s25, 128
          %s821 = scalar_lea.hbm %s5, %s820
          %s823 = sshll.u32 %s813, 4
          %s824 = int_to_ptr.vmem [resolvable:$true] %s823
          %826 = dma.vmem_to_hbm [thread:$0]  %s824, 128, %s821, %s810
        $region78: #{tpu_custom_call.1} parent=69 // pred_fallthru
          _
      $region70: #{tpu_custom_call.1} parent=5 // pred_fallthru
        _
      %p827 = scmp.le.s32.totalorder 2, %s20
      // Predicated region
      $region79: #{tpu_custom_call.1} parent=5 // pred_check
        %p828 = pneg %p827
      $region80: #{tpu_custom_call.1} parent=5 // pred_check_branch
        %830 = sbr.rel (%p828) target = $region82
      $region81: #{tpu_custom_call.1} parent=5 // pred_region
        %s831 = ssub.s32 %s20, 2
        // Predicated region
        $region83: #{tpu_custom_call.1} parent=81 // pred_check
          %p832 = pneg %p148
        $region84: #{tpu_custom_call.1} parent=81 // pred_check_branch
          %834 = sbr.rel (%p832) target = $region86
        $region85: #{tpu_custom_call.1} parent=81 // pred_region
          %s835 = sand.u32 %s133, 1
          %s836 = scalar_lea.sflag [#allocation6], %s835
          %s837 = sand.u32 %s133, 1
          %s838 = smul.addr %s837, 8
          %s839 = scalar_lea.vmem [#allocation5], %s838
          %840 = dma.done %s836, 128
        $region86: #{tpu_custom_call.1} parent=81 // pred_fallthru
          _
      $region82: #{tpu_custom_call.1} parent=5 // pred_fallthru
        _
    $region6: #{tpu_custom_call.1} parent=1 // loop_footer
      %s24 = sadd.s32 1, %s20
    $region7: #{tpu_custom_call.1} parent=1 // loop_footer_branch
      %19 = sbr.rel target = $region3
    $region8: #{tpu_custom_call.1} parent=1 // loop_exit
      _
    %841 = vsyncpa [#allocation6], 1
    %s842 = scalar_lea.sflag [#allocation6], 1
    %843 = vsyncpa %s842, 1

</llo_original>
